<compile_context>
chip_gen: v5e
topology: v5e:2x2
jax: 0.10.0
libtpu: 0.0.40
codegen_flags: <defaults>
</compile_context>

<pallas_src>
import functools

import jax
import jax.numpy as jnp
import numpy as np
from jax.experimental import pallas as pl
from jax.experimental.pallas import tpu as pltpu


def _round_up(x: int, m: int) -> int:
    return (x + m - 1) // m * m


def _fold_lanes(x):
    """Sum a (tm, tn) tile down to (tm, 128) with lane-aligned VPU adds only."""
    lanes = 128
    tn = x.shape[-1]
    acc = x[:, :lanes]
    for c in range(1, tn // lanes):
        acc = acc + x[:, c * lanes:(c + 1) * lanes]
    return acc


def _sc_loss_kernel(fn_m_ref, fn_nT_ref, lab_m_ref, lab_n_ref, cnt_ref,
                    diag_ref, out_ref, exp_acc, pos_acc, *, num_pad_cols: int):
    j = pl.program_id(1)

    @pl.when(j == 0)
    def _init():
        exp_acc[...] = jnp.zeros_like(exp_acc)
        pos_acc[...] = jnp.zeros_like(pos_acc)

    # (tm, D) bf16 @ (D, tn) bf16 -> (tm, tn) f32 on the MXU.  1/T is already
    # folded into the normalized inputs, so s == <f_i, f_j> / T directly.
    s = jnp.dot(fn_m_ref[...], fn_nT_ref[...], preferred_element_type=jnp.float32)

    # exp over every column.  Padded columns are zero vectors -> each adds
    # exactly exp(0) = 1; that constant is removed once at finalization, so no
    # per-tile validity mask is needed.
    e = jnp.exp(s)                                   # (tm, tn)  EUP
    exp_acc[...] += _fold_lanes(e)                   # (tm, 128) VPU adds only

    # Same-label similarity sum (includes the diagonal; removed at the end).
    same = lab_m_ref[...] == lab_n_ref[...]          # (tm,1)==(1,tn) -> (tm,tn)
    pos_acc[...] += _fold_lanes(jnp.where(same, s, 0.0))

    @pl.when(j == pl.num_programs(1) - 1)
    def _finalize():
        # One cross-lane (XLU) reduce per row block, amortized over the column loop.
        exp_sum = jnp.sum(exp_acc[...], axis=1, keepdims=True)   # (tm, 1)
        pos_sum = jnp.sum(pos_acc[...], axis=1, keepdims=True)   # (tm, 1)

        diag_s = diag_ref[...]                 # hoisted exact s_ii = ||fn_i||^2 / T
        # NOTE: subtracting exp(diag) (~exp(1/T)) from the accumulated sum can
        # cancel a few digits for very small N / strongly negative off-diagonal
        # similarities; the clamp keeps log() finite.  Fine at T ~ 0.3.
        other = jnp.maximum(exp_sum - jnp.exp(diag_s) - float(num_pad_cols), 1e-30)
        log_other = jnp.log(other)

        cnt = cnt_ref[...]                     # (tm,1) = (#same-label - 1), hoisted
        has_pos = cnt > 0.0
        pos_mean = (pos_sum - diag_s) / jnp.maximum(cnt, 1.0)

        loss_rows = jnp.where(has_pos, log_other - pos_mean, 0.0)
        out_ref[...] = jnp.full(out_ref.shape, jnp.sum(loss_rows), dtype=out_ref.dtype)


def _vmem_limit_bytes() -> int:
    # v5e / v6e expose >= 128 MiB physical VMEM -> allow a 64 MiB scoped limit;
    # v7x has only 64 MiB per TensorCore -> stay at the safe 32 MiB default.
    try:
        cap = int(pltpu.get_tpu_info().vmem_capacity_bytes)
    except Exception:
        cap = 0
    return (64 if cap >= 128 * 1024 * 1024 else 32) * 1024 * 1024


def _vmem_bytes_estimate(tm: int, tn: int, d_pad: int) -> int:
    bf16, f32 = 2, 4
    b = 2 * tm * d_pad * bf16           # resident row block, double-buffered
    b += 2 * d_pad * tn * bf16          # streamed (D, tn) column block, double-buffered
    b += 2 * 3 * tm * 128 * f32         # lab_m / cnt / diag (lane-padded), double-buffered
    b += 2 * 8 * tn * f32               # lab_n (sublane-padded)
    b += 2 * tm * 128 * f32             # exp / pos accumulators
    b += 5 * tm * tn * f32              # in-kernel (tm,tn) temporaries (s, exp, where, folds)
    b += 2 * 8 * 128 * f32              # per-row-block output
    return b


def _pick_tiles(n_pad: int, d_pad: int, budget: int):
    # tm is the HBM-bandwidth lever (streamed fn^T traffic ~ N^2*D/tm): grow it
    # first.  tn only changes grid-step count / MXU pass width; keep <= 256.
    for tm in (512, 256, 128):
        if n_pad % tm:
            continue
        for tn in (256, 128):
            if n_pad % tn:
                continue
            if _vmem_bytes_estimate(tm, tn, d_pad) <= budget:
                return tm, tn
    # TODO(synk): for very large D add an inner K axis over D (with a (tm,tn)
    # f32 s-accumulator) instead of keeping the full feature dim resident.
    return 128, 128


def sc_loss(features, labels, *, temperature: float = 0.3,
            mean_reduction: bool = False, core_parallel_rows: bool = False):
    """features: (N, D) float, labels: (N,) int -> scalar float32 loss."""
    n, d = features.shape
    labels = labels.astype(jnp.int32)

    # L2-normalize in f32 (torch.nn.functional.normalize, eps=1e-12) and fold
    # sqrt(1/T) into the same fused scale, then cast to bf16 for the MXU.
    f = features.astype(jnp.float32)
    norm = jnp.sqrt(jnp.sum(f * f, axis=1, keepdims=True))
    scale = (1.0 / float(temperature)) ** 0.5
    fn = (f * (scale / jnp.maximum(norm, 1e-12))).astype(jnp.bfloat16)

    # pos_count (#same-label - 1) via sort + searchsorted: O(N log N), no (N,N)
    # comparison matrix materialized in HBM ahead of the kernel.
    sorted_lab = jnp.sort(labels)
    cnt = (jnp.searchsorted(sorted_lab, labels, side="right")
           - jnp.searchsorted(sorted_lab, labels, side="left")
           ).astype(jnp.float32) - 1.0

    # Padding: N -> tile multiple (prefer a 512 multiple when cheap), D -> 128.
    n_pad = _round_up(n, 128)
    if _round_up(n, 512) - n_pad <= n_pad // 8:
        n_pad = _round_up(n, 512)
    d_pad = _round_up(d, 128)

    vmem_limit = _vmem_limit_bytes()
    tm, tn = _pick_tiles(n_pad, d_pad, int(vmem_limit * 0.8))

    fn_p = jnp.pad(fn, ((0, n_pad - n), (0, d_pad - d)))       # (N_pad, D_pad) bf16
    fn_t = fn_p.T                                              # (D_pad, N_pad) bf16
    # Exact bf16 diagonal s_ii = ||fn_i||^2 / T, hoisted out of the kernel.
    diag = jnp.sum(fn_p.astype(jnp.float32) ** 2, axis=1, keepdims=True)

    sentinel = jnp.iinfo(jnp.int32).min   # padded features are 0, so harmless anyway
    lab_p = jnp.pad(labels, (0, n_pad - n), constant_values=sentinel)
    lab_m = lab_p.reshape(n_pad, 1)
    lab_n = lab_p.reshape(1, n_pad)
    cnt_p = jnp.pad(cnt, (0, n_pad - n)).reshape(n_pad, 1)

    num_rb = n_pad // tm
    grid = (num_rb, n_pad // tn)

    # "parallel" vs "arbitrary" barely changes codegen; only core-parallel does.
    # Enable core_parallel_rows on v7x (2 TensorCores) when num_rb is even.
    row_sem = (pltpu.CORE_PARALLEL
               if (core_parallel_rows and num_rb >= 2 and num_rb % 2 == 0)
               else pltpu.PARALLEL)

    kernel = functools.partial(_sc_loss_kernel, num_pad_cols=n_pad - n)
    out = pl.pallas_call(
        kernel,
        out_shape=jax.ShapeDtypeStruct((num_rb, 8, 128), jnp.float32),
        grid_spec=pltpu.PrefetchScalarGridSpec(
            num_scalar_prefetch=0,
            grid=grid,
            in_specs=[
                pl.BlockSpec((tm, d_pad), lambda i, j: (i, 0)),   # resident row block
                pl.BlockSpec((d_pad, tn), lambda i, j: (0, j)),   # streamed (D, tn) cols
                pl.BlockSpec((tm, 1), lambda i, j: (i, 0)),       # row labels
                pl.BlockSpec((1, tn), lambda i, j: (0, j)),       # col labels
                pl.BlockSpec((tm, 1), lambda i, j: (i, 0)),       # pos_count (hoisted)
                pl.BlockSpec((tm, 1), lambda i, j: (i, 0)),       # diag s_ii (hoisted)
            ],
            out_specs=pl.BlockSpec((1, 8, 128), lambda i, j: (i, 0, 0)),
            scratch_shapes=[pltpu.VMEM((tm, 128), jnp.float32),   # exp-sum accum
                            pltpu.VMEM((tm, 128), jnp.float32)],  # pos-sum accum
        ),
        compiler_params=pltpu.CompilerParams(
            dimension_semantics=(row_sem, pltpu.ARBITRARY),
            vmem_limit_bytes=vmem_limit),
    )(fn_p, fn_t, lab_m, lab_n, cnt_p, diag)

    loss = jnp.sum(out[:, 0, 0])
    if mean_reduction:
        loss = loss / jnp.sum((cnt > 0.0).astype(jnp.float32))
    return loss


def sc_loss_ref(features, labels, temperature: float = 0.3,
                mean_reduction: bool = False):
    """Pure-JAX f32 reference mirroring the PyTorch loop semantics."""
    f = features / jnp.maximum(
        jnp.linalg.norm(features, axis=1, keepdims=True), 1e-12)
    s = (f @ f.T) / temperature
    n = f.shape[0]
    eye = jnp.eye(n, dtype=bool)
    pos = (labels[:, None] == labels[None, :]) & (~eye)
    log_other = jnp.log(jnp.sum(jnp.where(~eye, jnp.exp(s), 0.0), axis=1))
    cnt = pos.sum(axis=1).astype(jnp.float32)
    ps = jnp.where(pos, s, 0.0).sum(axis=1)
    has = cnt > 0
    li = jnp.where(has, log_other - ps / jnp.maximum(cnt, 1.0), 0.0)
    loss = li.sum()
    if mean_reduction:
        loss = loss / has.sum()
    return loss


if __name__ == "__main__":
    key = jax.random.PRNGKey(0)
    kf, kl = jax.random.split(key)
    N, D = 8, 32
    features = jax.random.normal(kf, (N, D), dtype=jnp.float32)
    labels = jax.random.randint(kl, (N,), 0, 3, dtype=jnp.int32)

    # bf16 MXU inputs -> compare against the f32 reference with a relaxed tolerance.
    loss = jax.block_until_ready(
        sc_loss(features, labels, temperature=0.3, mean_reduction=False))
    ref = sc_loss_ref(features, labels, temperature=0.3, mean_reduction=False)
    np.testing.assert_allclose(np.asarray(loss), np.asarray(ref),
                               rtol=1e-2, atol=1e-2)

    loss_m = jax.block_until_ready(
        sc_loss(features, labels, temperature=0.3, mean_reduction=True))
    ref_m = sc_loss_ref(features, labels, temperature=0.3, mean_reduction=True)
    np.testing.assert_allclose(np.asarray(loss_m), np.asarray(ref_m),
                               rtol=1e-2, atol=1e-2)

    print("KERNEL_OK")
</pallas_src>

<mosaic_0001>
module attributes {stable_mosaic.version = 11 : i64} {
  func.func @_sc_loss_kernel(%arg0: i32, %arg1: i32, %arg2: memref<128x128xbf16, #tpu.memory_space<vmem>>, %arg3: memref<128x128xbf16, #tpu.memory_space<vmem>>, %arg4: memref<128x1xi32, #tpu.memory_space<vmem>>, %arg5: memref<1x128xi32, #tpu.memory_space<vmem>>, %arg6: memref<128x1xf32, #tpu.memory_space<vmem>>, %arg7: memref<128x1xf32, #tpu.memory_space<vmem>>, %arg8: memref<1x8x128xf32, #tpu.memory_space<vmem>>, %arg9: memref<128x128xf32, #tpu.memory_space<vmem>>, %arg10: memref<128x128xf32, #tpu.memory_space<vmem>>) attributes {dimension_semantics = [#tpu.dimension_semantics<parallel>, #tpu.dimension_semantics<arbitrary>], iteration_bounds = array<i64: 1, 1>, scalar_prefetch = 0 : i64, scratch_operands = 2 : i64, tpu.core_type = #tpu.core_type<tc>, window_params = [{transform_indices = @transform_0, window_bounds = array<i64: 128, 128>}, {transform_indices = @transform_1, window_bounds = array<i64: 128, 128>}, {transform_indices = @transform_2, window_bounds = array<i64: 128, 1>}, {transform_indices = @transform_3, window_bounds = array<i64: 1, 128>}, {transform_indices = @transform_4, window_bounds = array<i64: 128, 1>}, {transform_indices = @transform_5, window_bounds = array<i64: 128, 1>}, {transform_indices = @transform_6, window_bounds = array<i64: 1, 8, 128>}]} {
    %c0_i32 = arith.constant 0 : i32
    %0 = arith.cmpi eq, %arg1, %c0_i32 : i32
    %1 = arith.extui %0 : i1 to i32
    %c0_i32_0 = arith.constant 0 : i32
    %2 = arith.cmpi ne, %1, %c0_i32_0 : i32
    scf.if %2 {
      %cst_19 = arith.constant 0.000000e+00 : f32
      %23 = vector.broadcast %cst_19 : f32 to vector<128x128xf32>
      %c0_20 = arith.constant 0 : index
      %c0_21 = arith.constant 0 : index
      %24 = vector.load %arg9[%c0_20, %c0_21] : memref<128x128xf32, #tpu.memory_space<vmem>>, vector<128x128xf32>
      tpu.vector_store %arg9[%c0_20, %c0_21], %23 {strides = array<i32>} : memref<128x128xf32, #tpu.memory_space<vmem>>, vector<128x128xf32>,
      %cst_22 = arith.constant 0.000000e+00 : f32
      %25 = vector.broadcast %cst_22 : f32 to vector<128x128xf32>
      %c0_23 = arith.constant 0 : index
      %c0_24 = arith.constant 0 : index
      %26 = vector.load %arg10[%c0_23, %c0_24] : memref<128x128xf32, #tpu.memory_space<vmem>>, vector<128x128xf32>
      tpu.vector_store %arg10[%c0_23, %c0_24], %25 {strides = array<i32>} : memref<128x128xf32, #tpu.memory_space<vmem>>, vector<128x128xf32>,
    } else {
    }
    %c0 = arith.constant 0 : index
    %c0_1 = arith.constant 0 : index
    %3 = vector.load %arg2[%c0, %c0_1] : memref<128x128xbf16, #tpu.memory_space<vmem>>, vector<128x128xbf16>
    %c0_2 = arith.constant 0 : index
    %c0_3 = arith.constant 0 : index
    %4 = vector.load %arg3[%c0_2, %c0_3] : memref<128x128xbf16, #tpu.memory_space<vmem>>, vector<128x128xbf16>
    %cst = arith.constant dense<0.000000e+00> : vector<128x128xf32>
    %5 = tpu.matmul %3, %4, %cst {dimension_numbers = #tpu.dot_dimension_numbers<[1], [0], [0], [1], [0, 0, 1, 1], [], []>} : vector<128x128xbf16>, vector<128x128xbf16>, vector<128x128xf32> -> vector<128x128xf32>
    %6 = math.exp %5 : vector<128x128xf32>
    %c0_4 = arith.constant 0 : index
    %c0_5 = arith.constant 0 : index
    %7 = vector.load %arg9[%c0_4, %c0_5] : memref<128x128xf32, #tpu.memory_space<vmem>>, vector<128x128xf32>
    %8 = arith.addf %7, %6 : vector<128x128xf32>
    %c0_6 = arith.constant 0 : index
    %c0_7 = arith.constant 0 : index
    %9 = vector.load %arg9[%c0_6, %c0_7] : memref<128x128xf32, #tpu.memory_space<vmem>>, vector<128x128xf32>
    tpu.vector_store %arg9[%c0_6, %c0_7], %8 {strides = array<i32>} : memref<128x128xf32, #tpu.memory_space<vmem>>, vector<128x128xf32>,
    %c0_8 = arith.constant 0 : index
    %c0_9 = arith.constant 0 : index
    %10 = vector.load %arg4[%c0_8, %c0_9] : memref<128x1xi32, #tpu.memory_space<vmem>>, vector<128x1xi32>
    %c0_10 = arith.constant 0 : index
    %c0_11 = arith.constant 0 : index
    %11 = vector.load %arg5[%c0_10, %c0_11] : memref<1x128xi32, #tpu.memory_space<vmem>>, vector<1x128xi32>
    %12 = vector.broadcast %10 : vector<128x1xi32> to vector<128x128xi32>
    %13 = vector.broadcast %11 : vector<1x128xi32> to vector<128x128xi32>
    %14 = arith.cmpi eq, %12, %13 : vector<128x128xi32>
    %c0_12 = arith.constant 0 : index
    %c0_13 = arith.constant 0 : index
    %15 = vector.load %arg10[%c0_12, %c0_13] : memref<128x128xf32, #tpu.memory_space<vmem>>, vector<128x128xf32>
    %cst_14 = arith.constant 0.000000e+00 : f32
    %16 = vector.broadcast %cst_14 : f32 to vector<128x128xf32>
    %17 = arith.select %14, %5, %16 : vector<128x128xi1>, vector<128x128xf32>
    %18 = arith.addf %15, %17 : vector<128x128xf32>
    %c0_15 = arith.constant 0 : index
    %c0_16 = arith.constant 0 : index
    %19 = vector.load %arg10[%c0_15, %c0_16] : memref<128x128xf32, #tpu.memory_space<vmem>>, vector<128x128xf32>
    tpu.vector_store %arg10[%c0_15, %c0_16], %18 {strides = array<i32>} : memref<128x128xf32, #tpu.memory_space<vmem>>, vector<128x128xf32>,
    %c0_i32_17 = arith.constant 0 : i32
    %20 = arith.cmpi eq, %arg1, %c0_i32_17 : i32
    %21 = arith.extui %20 : i1 to i32
    %c0_i32_18 = arith.constant 0 : i32
    %22 = arith.cmpi ne, %21, %c0_i32_18 : i32
    scf.if %22 {
      %c0_19 = arith.constant 0 : index
      %c0_20 = arith.constant 0 : index
      %23 = vector.load %arg9[%c0_19, %c0_20] : memref<128x128xf32, #tpu.memory_space<vmem>>, vector<128x128xf32>
      %cst_21 = arith.constant dense<0.000000e+00> : vector<128xf32>
      %24 = vector.multi_reduction <add>, %23, %cst_21 [1] : vector<128x128xf32> to vector<128xf32>
      %25 = vector.shape_cast %24 : vector<128xf32> to vector<128x1xf32>
      %c0_22 = arith.constant 0 : index
      %c0_23 = arith.constant 0 : index
      %26 = vector.load %arg10[%c0_22, %c0_23] : memref<128x128xf32, #tpu.memory_space<vmem>>, vector<128x128xf32>
      %cst_24 = arith.constant dense<0.000000e+00> : vector<128xf32>
      %27 = vector.multi_reduction <add>, %26, %cst_24 [1] : vector<128x128xf32> to vector<128xf32>
      %28 = vector.shape_cast %27 : vector<128xf32> to vector<128x1xf32>
      %c0_25 = arith.constant 0 : index
      %c0_26 = arith.constant 0 : index
      %29 = vector.load %arg7[%c0_25, %c0_26] : memref<128x1xf32, #tpu.memory_space<vmem>>, vector<128x1xf32>
      %30 = math.exp %29 : vector<128x1xf32>
      %31 = arith.subf %25, %30 : vector<128x1xf32>
      %cst_27 = arith.constant 1.200000e+02 : f32
      %32 = vector.broadcast %cst_27 : f32 to vector<128x1xf32>
      %33 = arith.subf %31, %32 : vector<128x1xf32>
      %cst_28 = arith.constant 1.000000e-30 : f32
      %34 = vector.broadcast %cst_28 : f32 to vector<128x1xf32>
      %35 = arith.maximumf %33, %34 : vector<128x1xf32>
      %36 = math.log %35 : vector<128x1xf32>
      %c0_29 = arith.constant 0 : index
      %c0_30 = arith.constant 0 : index
      %37 = vector.load %arg6[%c0_29, %c0_30] : memref<128x1xf32, #tpu.memory_space<vmem>>, vector<128x1xf32>
      %cst_31 = arith.constant 0.000000e+00 : f32
      %38 = vector.broadcast %cst_31 : f32 to vector<128x1xf32>
      %39 = arith.cmpf ogt, %37, %38 : vector<128x1xf32>
      %40 = arith.subf %28, %29 : vector<128x1xf32>
      %cst_32 = arith.constant 1.000000e+00 : f32
      %41 = vector.broadcast %cst_32 : f32 to vector<128x1xf32>
      %42 = arith.maximumf %37, %41 : vector<128x1xf32>
      %43 = arith.divf %40, %42 : vector<128x1xf32>
      %44 = arith.subf %36, %43 : vector<128x1xf32>
      %cst_33 = arith.constant 0.000000e+00 : f32
      %45 = vector.broadcast %cst_33 : f32 to vector<128x1xf32>
      %46 = arith.select %39, %44, %45 : vector<128x1xi1>, vector<128x1xf32>
      %47 = vector.shape_cast %46 : vector<128x1xf32> to vector<1x128x1xf32>
      %cst_34 = arith.constant dense<0.000000e+00> : vector<1xf32>
      %48 = vector.multi_reduction <add>, %47, %cst_34 [1, 2] : vector<1x128x1xf32> to vector<1xf32>
      %49 = vector.shape_cast %48 : vector<1xf32> to vector<1x1x1xf32>
      %50 = vector.extract %49[0, 0, 0] : f32 from vector<1x1x1xf32>
      %51 = vector.broadcast %50 : f32 to vector<1x8x128xf32>
      %c0_35 = arith.constant 0 : index
      %c0_36 = arith.constant 0 : index
      %c0_37 = arith.constant 0 : index
      %52 = vector.load %arg8[%c0_35, %c0_36, %c0_37] : memref<1x8x128xf32, #tpu.memory_space<vmem>>, vector<1x8x128xf32>
      tpu.vector_store %arg8[%c0_35, %c0_36, %c0_37], %51 {strides = array<i32>} : memref<1x8x128xf32, #tpu.memory_space<vmem>>, vector<1x8x128xf32>,
    } else {
    }
    return
  }
  func.func @transform_0(%arg0: i32, %arg1: i32) -> (i32, i32) {
    %c0_i32 = arith.constant 0 : i32
    %c0_i32_0 = arith.constant 0 : i32
    return %arg0, %c0_i32 : i32, i32
  }
  func.func @transform_1(%arg0: i32, %arg1: i32) -> (i32, i32) {
    %c0_i32 = arith.constant 0 : i32
    %c0_i32_0 = arith.constant 0 : i32
    return %c0_i32, %arg1 : i32, i32
  }
  func.func @transform_2(%arg0: i32, %arg1: i32) -> (i32, i32) {
    %c0_i32 = arith.constant 0 : i32
    %c0_i32_0 = arith.constant 0 : i32
    return %arg0, %c0_i32 : i32, i32
  }
  func.func @transform_3(%arg0: i32, %arg1: i32) -> (i32, i32) {
    %c0_i32 = arith.constant 0 : i32
    %c0_i32_0 = arith.constant 0 : i32
    return %c0_i32, %arg1 : i32, i32
  }
  func.func @transform_4(%arg0: i32, %arg1: i32) -> (i32, i32) {
    %c0_i32 = arith.constant 0 : i32
    %c0_i32_0 = arith.constant 0 : i32
    return %arg0, %c0_i32 : i32, i32
  }
  func.func @transform_5(%arg0: i32, %arg1: i32) -> (i32, i32) {
    %c0_i32 = arith.constant 0 : i32
    %c0_i32_0 = arith.constant 0 : i32
    return %arg0, %c0_i32 : i32, i32
  }
  func.func @transform_6(%arg0: i32, %arg1: i32) -> (i32, i32, i32) {
    %c0_i32 = arith.constant 0 : i32
    %c0_i32_0 = arith.constant 0 : i32
    %c0_i32_1 = arith.constant 0 : i32
    return %arg0, %c0_i32, %c0_i32_0 : i32, i32, i32
  }
}

</mosaic_0001>

<llo_original>
// kernel: tpu_custom_call.1
$region0: #{tpu_custom_call.1}
  #allocation0 [shape = 'u32[]', space=smem, size = 0x4, offset = 0x4, fixed_abs, tag = 'smem constant byte address 0x4 - core index']
  #allocation1 [shape = 'u32[72,128]{1,0:T(1,128)}', space=vmem, size = 0x9000, scoped, tag = 'internal scratch']
  #allocation2 [shape = 'f32[128,128]{1,0:T(8,128)}', space=vmem, size = 0x10000, scoped, tag = 'scratch operand']
  #allocation3 [shape = 'f32[128,128]{1,0:T(8,128)}', space=vmem, size = 0x10000, scoped, tag = 'scratch operand']
  %s0 = inlined_call_operand.vmem [shape: bf16[128,128], index: 0, kind: input, shape index: {}]
  %s1 = inlined_call_operand.vmem [shape: bf16[128,128], index: 1, kind: input, shape index: {}]
  %s2 = inlined_call_operand.vmem [shape: s32[128,1], index: 2, kind: input, shape index: {}]
  %s3 = inlined_call_operand.vmem [shape: s32[1,128], index: 3, kind: input, shape index: {}]
  %s4 = inlined_call_operand.vmem [shape: f32[128,1], index: 4, kind: input, shape index: {}]
  %s5 = inlined_call_operand.vmem [shape: f32[128,1], index: 5, kind: input, shape index: {}]
  %s6 = inlined_call_operand.hbm [shape: f32[1,8,128], index: 6, kind: output, shape index: {}]
  %s7 = sld [smem:[#allocation0]]
  $region42: #{tpu_custom_call.1} parent=0
    _
  %s9 = ssub.s32 1, %s7
  %s10 = scalar_select 0, %s9, %s7
  $region1: #{tpu_custom_call.1} parent=0
    #allocation4 [shape = 'u8[4096]{0}', space=vmem, size = 0x1000, scoped, tag = 'output window, operand 0, single buffered']
    #allocation5 [shape = 's32[1]{0}', space=sflag, size = 0x4, scoped, tag = 'scoped memory for tpu_custom_call.1']
    %11 = vsyncpa [#allocation5], 0
    // Predicated region
    $region2: #{tpu_custom_call.1} parent=1 // pred_check
      _
    $region3: #{tpu_custom_call.1} parent=1 // pred_check_branch
      %13 = sbr.rel (0) target = $region5
    $region4: #{tpu_custom_call.1} parent=1 // pred_region
      _
    $region5: #{tpu_custom_call.1} parent=1 // pred_fallthru
      _
    // Predicated region
    $region6: #{tpu_custom_call.1} parent=1 // pred_check
      _
    $region7: #{tpu_custom_call.1} parent=1 // pred_check_branch
      %15 = sbr.rel (0) target = $region9
    $region8: #{tpu_custom_call.1} parent=1 // pred_region
      _
    $region9: #{tpu_custom_call.1} parent=1 // pred_fallthru
      _
    // Predicated region
    $region10: #{tpu_custom_call.1} parent=1 // pred_check
      _
    $region11: #{tpu_custom_call.1} parent=1 // pred_check_branch
      %17 = sbr.rel (0) target = $region13
    $region12: #{tpu_custom_call.1} parent=1 // pred_region
      _
    $region13: #{tpu_custom_call.1} parent=1 // pred_fallthru
      _
    // Predicated region
    $region14: #{tpu_custom_call.1} parent=1 // pred_check
      _
    $region15: #{tpu_custom_call.1} parent=1 // pred_check_branch
      %19 = sbr.rel (0) target = $region17
    $region16: #{tpu_custom_call.1} parent=1 // pred_region
      _
    $region17: #{tpu_custom_call.1} parent=1 // pred_fallthru
      _
    // Predicated region
    $region18: #{tpu_custom_call.1} parent=1 // pred_check
      _
    $region19: #{tpu_custom_call.1} parent=1 // pred_check_branch
      %21 = sbr.rel (0) target = $region21
    $region20: #{tpu_custom_call.1} parent=1 // pred_region
      _
    $region21: #{tpu_custom_call.1} parent=1 // pred_fallthru
      _
    // Predicated region
    $region22: #{tpu_custom_call.1} parent=1 // pred_check
      _
    $region23: #{tpu_custom_call.1} parent=1 // pred_check_branch
      %23 = sbr.rel (0) target = $region25
    $region24: #{tpu_custom_call.1} parent=1 // pred_region
      _
    $region25: #{tpu_custom_call.1} parent=1 // pred_fallthru
      _
    %p24 = scmp.eq.s32.totalorder 0, 0
    // Predicated region
    $region26: #{tpu_custom_call.1} parent=1 // pred_check
      %p25 = pneg %p24
    $region27: #{tpu_custom_call.1} parent=1 // pred_check_branch
      %27 = sbr.rel (%p25) target = $region29
    $region28: #{tpu_custom_call.1} parent=1 // pred_region
      %28 = vst [vmem:[#allocation2] sm:$0xff] 0.0
      %29 = vst [vmem:[#allocation2 + $0x8] sm:$0xff] 0.0
      %30 = vst [vmem:[#allocation2 + $0x10] sm:$0xff] 0.0
      %31 = vst [vmem:[#allocation2 + $0x18] sm:$0xff] 0.0
      %32 = vst [vmem:[#allocation2 + $0x20] sm:$0xff] 0.0
      %33 = vst [vmem:[#allocation2 + $0x28] sm:$0xff] 0.0
      %34 = vst [vmem:[#allocation2 + $0x30] sm:$0xff] 0.0
      %35 = vst [vmem:[#allocation2 + $0x38] sm:$0xff] 0.0
      %36 = vst [vmem:[#allocation2 + $0x40] sm:$0xff] 0.0
      %37 = vst [vmem:[#allocation2 + $0x48] sm:$0xff] 0.0
      %38 = vst [vmem:[#allocation2 + $0x50] sm:$0xff] 0.0
      %39 = vst [vmem:[#allocation2 + $0x58] sm:$0xff] 0.0
      %40 = vst [vmem:[#allocation2 + $0x60] sm:$0xff] 0.0
      %41 = vst [vmem:[#allocation2 + $0x68] sm:$0xff] 0.0
      %42 = vst [vmem:[#allocation2 + $0x70] sm:$0xff] 0.0
      %43 = vst [vmem:[#allocation2 + $0x78] sm:$0xff] 0.0
      %44 = vst [vmem:[#allocation3] sm:$0xff] 0.0
      %45 = vst [vmem:[#allocation3 + $0x8] sm:$0xff] 0.0
      %46 = vst [vmem:[#allocation3 + $0x10] sm:$0xff] 0.0
      %47 = vst [vmem:[#allocation3 + $0x18] sm:$0xff] 0.0
      %48 = vst [vmem:[#allocation3 + $0x20] sm:$0xff] 0.0
      %49 = vst [vmem:[#allocation3 + $0x28] sm:$0xff] 0.0
      %50 = vst [vmem:[#allocation3 + $0x30] sm:$0xff] 0.0
      %51 = vst [vmem:[#allocation3 + $0x38] sm:$0xff] 0.0
      %52 = vst [vmem:[#allocation3 + $0x40] sm:$0xff] 0.0
      %53 = vst [vmem:[#allocation3 + $0x48] sm:$0xff] 0.0
      %54 = vst [vmem:[#allocation3 + $0x50] sm:$0xff] 0.0
      %55 = vst [vmem:[#allocation3 + $0x58] sm:$0xff] 0.0
      %56 = vst [vmem:[#allocation3 + $0x60] sm:$0xff] 0.0
      %57 = vst [vmem:[#allocation3 + $0x68] sm:$0xff] 0.0
      %58 = vst [vmem:[#allocation3 + $0x70] sm:$0xff] 0.0
      %59 = vst [vmem:[#allocation3 + $0x78] sm:$0xff] 0.0
    $region29: #{tpu_custom_call.1} parent=1 // pred_fallthru
      _
    %v60 = vld [vmem:[%s0] sm:$0xf]
    %v61 = vld [vmem:[%s0 + $0x4] sm:$0xf]
    %v62 = vld [vmem:[%s0 + $0x8] sm:$0xf]
    %v63 = vld [vmem:[%s0 + $0xc] sm:$0xf]
    %v64 = vld [vmem:[%s0 + $0x10] sm:$0xf]
    %v65 = vld [vmem:[%s0 + $0x14] sm:$0xf]
    %v66 = vld [vmem:[%s0 + $0x18] sm:$0xf]
    %v67 = vld [vmem:[%s0 + $0x1c] sm:$0xf]
    %v68 = vld [vmem:[%s0 + $0x20] sm:$0xf]
    %v69 = vld [vmem:[%s0 + $0x24] sm:$0xf]
    %v70 = vld [vmem:[%s0 + $0x28] sm:$0xf]
    %v71 = vld [vmem:[%s0 + $0x2c] sm:$0xf]
    %v72 = vld [vmem:[%s0 + $0x30] sm:$0xf]
    %v73 = vld [vmem:[%s0 + $0x34] sm:$0xf]
    %v74 = vld [vmem:[%s0 + $0x38] sm:$0xf]
    %v75 = vld [vmem:[%s0 + $0x3c] sm:$0xf]
    %v76 = vld [vmem:[%s1] sm:$0xf]
    %v77 = vld [vmem:[%s1 + $0x4] sm:$0xf]
    %v78 = vld [vmem:[%s1 + $0x8] sm:$0xf]
    %v79 = vld [vmem:[%s1 + $0xc] sm:$0xf]
    %v80 = vld [vmem:[%s1 + $0x10] sm:$0xf]
    %v81 = vld [vmem:[%s1 + $0x14] sm:$0xf]
    %v82 = vld [vmem:[%s1 + $0x18] sm:$0xf]
    %v83 = vld [vmem:[%s1 + $0x1c] sm:$0xf]
    %v84 = vld [vmem:[%s1 + $0x20] sm:$0xf]
    %v85 = vld [vmem:[%s1 + $0x24] sm:$0xf]
    %v86 = vld [vmem:[%s1 + $0x28] sm:$0xf]
    %v87 = vld [vmem:[%s1 + $0x2c] sm:$0xf]
    %v88 = vld [vmem:[%s1 + $0x30] sm:$0xf]
    %v89 = vld [vmem:[%s1 + $0x34] sm:$0xf]
    %v90 = vld [vmem:[%s1 + $0x38] sm:$0xf]
    %v91 = vld [vmem:[%s1 + $0x3c] sm:$0xf]
    %v108 = vunpack.c.l.b16 %v60
    %v109 = vunpack.c.l.b16 %v61
    %v110 = vunpack.c.l.b16 %v62
    %v111 = vunpack.c.l.b16 %v63
    %v112 = vunpack.c.l.b16 %v64
    %v113 = vunpack.c.l.b16 %v65
    %v114 = vunpack.c.l.b16 %v66
    %v115 = vunpack.c.l.b16 %v67
    %v116 = vunpack.c.l.b16 %v68
    %v117 = vunpack.c.l.b16 %v69
    %v118 = vunpack.c.l.b16 %v70
    %v119 = vunpack.c.l.b16 %v71
    %v120 = vunpack.c.l.b16 %v72
    %v121 = vunpack.c.l.b16 %v73
    %v122 = vunpack.c.l.b16 %v74
    %v123 = vunpack.c.l.b16 %v75
    %v124 = vpack.c.b16 %v109, %v108
    %v125 = vpack.c.b16 %v111, %v110
    %v126 = vpack.c.b16 %v113, %v112
    %v127 = vpack.c.b16 %v115, %v114
    %v128 = vpack.c.b16 %v117, %v116
    %v129 = vpack.c.b16 %v119, %v118
    %v130 = vpack.c.b16 %v121, %v120
    %v131 = vpack.c.b16 %v123, %v122
    %v156 = vunpack.c.l.b16 %v76
    %v157 = vunpack.c.l.b16 %v77
    %v158 = vunpack.c.l.b16 %v78
    %v159 = vunpack.c.l.b16 %v79
    %v160 = vunpack.c.l.b16 %v80
    %v161 = vunpack.c.l.b16 %v81
    %v162 = vunpack.c.l.b16 %v82
    %v163 = vunpack.c.l.b16 %v83
    %v164 = vunpack.c.l.b16 %v84
    %v165 = vunpack.c.l.b16 %v85
    %v166 = vunpack.c.l.b16 %v86
    %v167 = vunpack.c.l.b16 %v87
    %v168 = vunpack.c.l.b16 %v88
    %v169 = vunpack.c.l.b16 %v89
    %v170 = vunpack.c.l.b16 %v90
    %v171 = vunpack.c.l.b16 %v91
    %v172 = vpack.c.b16 %v157, %v156
    %v173 = vpack.c.b16 %v159, %v158
    %v174 = vpack.c.b16 %v161, %v160
    %v175 = vpack.c.b16 %v163, %v162
    %v176 = vpack.c.b16 %v165, %v164
    %v177 = vpack.c.b16 %v167, %v166
    %v178 = vpack.c.b16 %v169, %v168
    %v179 = vpack.c.b16 %v171, %v170
    %188 = vmatpush.bf16.msra.mxu0 %v179
    %189 = vmatpush.bf16.msra.mxu0 %v178
    %190 = vmatpush.bf16.msra.mxu0 %v177
    %191 = vmatpush.bf16.msra.mxu0 %v176
    %192 = vmatpush.bf16.msra.mxu0 %v175
    %193 = vmatpush.bf16.msra.mxu0 %v174
    %194 = vmatpush.bf16.msra.mxu0 %v173
    %195 = vmatpush.bf16.msra.mxu0 %v172
    %196 = vmatmul.bf16.gmra.mxu0 %v124
    %v197 = vpop.f32.mrf.mxu0
    %v198 = vadd.f32 0.0, %v197
    %v199 = vpop.f32.mrf.mxu0
    %v200 = vadd.f32 0.0, %v199
    %201 = vmatmul.bf16.gmra.mxu0 %v125
    %v202 = vpop.f32.mrf.mxu0
    %v203 = vadd.f32 0.0, %v202
    %v204 = vpop.f32.mrf.mxu0
    %v205 = vadd.f32 0.0, %v204
    %206 = vmatmul.bf16.gmra.mxu0 %v126
    %v207 = vpop.f32.mrf.mxu0
    %v208 = vadd.f32 0.0, %v207
    %v209 = vpop.f32.mrf.mxu0
    %v210 = vadd.f32 0.0, %v209
    %211 = vmatmul.bf16.gmra.mxu0 %v127
    %v212 = vpop.f32.mrf.mxu0
    %v213 = vadd.f32 0.0, %v212
    %v214 = vpop.f32.mrf.mxu0
    %v215 = vadd.f32 0.0, %v214
    %216 = vmatmul.bf16.gmra.mxu0 %v128
    %v217 = vpop.f32.mrf.mxu0
    %v218 = vadd.f32 0.0, %v217
    %v219 = vpop.f32.mrf.mxu0
    %v220 = vadd.f32 0.0, %v219
    %221 = vmatmul.bf16.gmra.mxu0 %v129
    %v222 = vpop.f32.mrf.mxu0
    %v223 = vadd.f32 0.0, %v222
    %v224 = vpop.f32.mrf.mxu0
    %v225 = vadd.f32 0.0, %v224
    %226 = vmatmul.bf16.gmra.mxu0 %v130
    %v227 = vpop.f32.mrf.mxu0
    %v228 = vadd.f32 0.0, %v227
    %v229 = vpop.f32.mrf.mxu0
    %v230 = vadd.f32 0.0, %v229
    %231 = vmatmul.bf16.gmra.mxu0 %v131
    %v232 = vpop.f32.mrf.mxu0
    %v233 = vadd.f32 0.0, %v232
    %v234 = vpop.f32.mrf.mxu0
    %v235 = vadd.f32 0.0, %v234
    %236 = vdwg.mxu0
    %v237 = vmul.f32 %v198, 1.442695
    %v238 = vpow.pop %v237
    %v239 = vmul.f32 %v200, 1.442695
    %v240 = vpow.pop %v239
    %v241 = vmul.f32 %v203, 1.442695
    %v242 = vpow.pop %v241
    %v243 = vmul.f32 %v205, 1.442695
    %v244 = vpow.pop %v243
    %v245 = vmul.f32 %v208, 1.442695
    %v246 = vpow.pop %v245
    %v247 = vmul.f32 %v210, 1.442695
    %v248 = vpow.pop %v247
    %v249 = vmul.f32 %v213, 1.442695
    %v250 = vpow.pop %v249
    %v251 = vmul.f32 %v215, 1.442695
    %v252 = vpow.pop %v251
    %v253 = vmul.f32 %v218, 1.442695
    %v254 = vpow.pop %v253
    %v255 = vmul.f32 %v220, 1.442695
    %v256 = vpow.pop %v255
    %v257 = vmul.f32 %v223, 1.442695
    %v258 = vpow.pop %v257
    %v259 = vmul.f32 %v225, 1.442695
    %v260 = vpow.pop %v259
    %v261 = vmul.f32 %v228, 1.442695
    %v262 = vpow.pop %v261
    %v263 = vmul.f32 %v230, 1.442695
    %v264 = vpow.pop %v263
    %v265 = vmul.f32 %v233, 1.442695
    %v266 = vpow.pop %v265
    %v267 = vmul.f32 %v235, 1.442695
    %v268 = vpow.pop %v267
    %v269 = vld [vmem:[#allocation2] sm:$0xff]
    %v270 = vld [vmem:[#allocation2 + $0x8] sm:$0xff]
    %v271 = vld [vmem:[#allocation2 + $0x10] sm:$0xff]
    %v272 = vld [vmem:[#allocation2 + $0x18] sm:$0xff]
    %v273 = vld [vmem:[#allocation2 + $0x20] sm:$0xff]
    %v274 = vld [vmem:[#allocation2 + $0x28] sm:$0xff]
    %v275 = vld [vmem:[#allocation2 + $0x30] sm:$0xff]
    %v276 = vld [vmem:[#allocation2 + $0x38] sm:$0xff]
    %v277 = vld [vmem:[#allocation2 + $0x40] sm:$0xff]
    %v278 = vld [vmem:[#allocation2 + $0x48] sm:$0xff]
    %v279 = vld [vmem:[#allocation2 + $0x50] sm:$0xff]
    %v280 = vld [vmem:[#allocation2 + $0x58] sm:$0xff]
    %v281 = vld [vmem:[#allocation2 + $0x60] sm:$0xff]
    %v282 = vld [vmem:[#allocation2 + $0x68] sm:$0xff]
    %v283 = vld [vmem:[#allocation2 + $0x70] sm:$0xff]
    %v284 = vld [vmem:[#allocation2 + $0x78] sm:$0xff]
    %v285 = vadd.f32 %v269, %v238
    %v286 = vadd.f32 %v270, %v240
    %v287 = vadd.f32 %v271, %v242
    %v288 = vadd.f32 %v272, %v244
    %v289 = vadd.f32 %v273, %v246
    %v290 = vadd.f32 %v274, %v248
    %v291 = vadd.f32 %v275, %v250
    %v292 = vadd.f32 %v276, %v252
    %v293 = vadd.f32 %v277, %v254
    %v294 = vadd.f32 %v278, %v256
    %v295 = vadd.f32 %v279, %v258
    %v296 = vadd.f32 %v280, %v260
    %v297 = vadd.f32 %v281, %v262
    %v298 = vadd.f32 %v282, %v264
    %v299 = vadd.f32 %v283, %v266
    %v300 = vadd.f32 %v284, %v268
    %301 = vst [vmem:[#allocation2] sm:$0xff] %v285
    %302 = vst [vmem:[#allocation2 + $0x8] sm:$0xff] %v286
    %303 = vst [vmem:[#allocation2 + $0x10] sm:$0xff] %v287
    %304 = vst [vmem:[#allocation2 + $0x18] sm:$0xff] %v288
    %305 = vst [vmem:[#allocation2 + $0x20] sm:$0xff] %v289
    %306 = vst [vmem:[#allocation2 + $0x28] sm:$0xff] %v290
    %307 = vst [vmem:[#allocation2 + $0x30] sm:$0xff] %v291
    %308 = vst [vmem:[#allocation2 + $0x38] sm:$0xff] %v292
    %309 = vst [vmem:[#allocation2 + $0x40] sm:$0xff] %v293
    %310 = vst [vmem:[#allocation2 + $0x48] sm:$0xff] %v294
    %311 = vst [vmem:[#allocation2 + $0x50] sm:$0xff] %v295
    %312 = vst [vmem:[#allocation2 + $0x58] sm:$0xff] %v296
    %313 = vst [vmem:[#allocation2 + $0x60] sm:$0xff] %v297
    %314 = vst [vmem:[#allocation2 + $0x68] sm:$0xff] %v298
    %315 = vst [vmem:[#allocation2 + $0x70] sm:$0xff] %v299
    %316 = vst [vmem:[#allocation2 + $0x78] sm:$0xff] %v300
    %v317 = vld [vmem:[%s2] sm:$0xff]
    %v318 = vld [vmem:[%s2 + $0x8] sm:$0xff]
    %v319 = vld [vmem:[%s2 + $0x10] sm:$0xff]
    %v320 = vld [vmem:[%s2 + $0x18] sm:$0xff]
    %v321 = vld [vmem:[%s2 + $0x20] sm:$0xff]
    %v322 = vld [vmem:[%s2 + $0x28] sm:$0xff]
    %v323 = vld [vmem:[%s2 + $0x30] sm:$0xff]
    %v324 = vld [vmem:[%s2 + $0x38] sm:$0xff]
    %v325 = vld [vmem:[%s2 + $0x40] sm:$0xff]
    %v326 = vld [vmem:[%s2 + $0x48] sm:$0xff]
    %v327 = vld [vmem:[%s2 + $0x50] sm:$0xff]
    %v328 = vld [vmem:[%s2 + $0x58] sm:$0xff]
    %v329 = vld [vmem:[%s2 + $0x60] sm:$0xff]
    %v330 = vld [vmem:[%s2 + $0x68] sm:$0xff]
    %v331 = vld [vmem:[%s2 + $0x70] sm:$0xff]
    %v332 = vld [vmem:[%s2 + $0x78] sm:$0xff]
    %v333 = vld [vmem:[%s3] sm:$0x1]
    %334 = vset.pattern.permute.xlu0 0
    %335 = vperm.xlu0 %334, %v317
    %v336 = vpop.permute.xlu0 %335
    %337 = vset.pattern.permute.xlu0 0
    %338 = vperm.xlu0 %337, %v318
    %v339 = vpop.permute.xlu0 %338
    %340 = vset.pattern.permute.xlu0 0
    %341 = vperm.xlu0 %340, %v319
    %v342 = vpop.permute.xlu0 %341
    %343 = vset.pattern.permute.xlu0 0
    %344 = vperm.xlu0 %343, %v320
    %v345 = vpop.permute.xlu0 %344
    %346 = vset.pattern.permute.xlu0 0
    %347 = vperm.xlu0 %346, %v321
    %v348 = vpop.permute.xlu0 %347
    %349 = vset.pattern.permute.xlu0 0
    %350 = vperm.xlu0 %349, %v322
    %v351 = vpop.permute.xlu0 %350
    %352 = vset.pattern.permute.xlu0 0
    %353 = vperm.xlu0 %352, %v323
    %v354 = vpop.permute.xlu0 %353
    %355 = vset.pattern.permute.xlu0 0
    %356 = vperm.xlu0 %355, %v324
    %v357 = vpop.permute.xlu0 %356
    %358 = vset.pattern.permute.xlu0 0
    %359 = vperm.xlu0 %358, %v325
    %v360 = vpop.permute.xlu0 %359
    %361 = vset.pattern.permute.xlu0 0
    %362 = vperm.xlu0 %361, %v326
    %v363 = vpop.permute.xlu0 %362
    %364 = vset.pattern.permute.xlu0 0
    %365 = vperm.xlu0 %364, %v327
    %v366 = vpop.permute.xlu0 %365
    %367 = vset.pattern.permute.xlu0 0
    %368 = vperm.xlu0 %367, %v328
    %v369 = vpop.permute.xlu0 %368
    %370 = vset.pattern.permute.xlu0 0
    %371 = vperm.xlu0 %370, %v329
    %v372 = vpop.permute.xlu0 %371
    %373 = vset.pattern.permute.xlu0 0
    %374 = vperm.xlu0 %373, %v330
    %v375 = vpop.permute.xlu0 %374
    %376 = vset.pattern.permute.xlu0 0
    %377 = vperm.xlu0 %376, %v331
    %v378 = vpop.permute.xlu0 %377
    %379 = vset.pattern.permute.xlu0 0
    %380 = vperm.xlu0 %379, %v332
    %v381 = vpop.permute.xlu0 %380
    %v382 = vperm.slane %v333, 0
    %vm383 = vcmp.eq.s32.totalorder %v336, %v382
    %vm384 = vcmp.eq.s32.totalorder %v339, %v382
    %vm385 = vcmp.eq.s32.totalorder %v342, %v382
    %vm386 = vcmp.eq.s32.totalorder %v345, %v382
    %vm387 = vcmp.eq.s32.totalorder %v348, %v382
    %vm388 = vcmp.eq.s32.totalorder %v351, %v382
    %vm389 = vcmp.eq.s32.totalorder %v354, %v382
    %vm390 = vcmp.eq.s32.totalorder %v357, %v382
    %vm391 = vcmp.eq.s32.totalorder %v360, %v382
    %vm392 = vcmp.eq.s32.totalorder %v363, %v382
    %vm393 = vcmp.eq.s32.totalorder %v366, %v382
    %vm394 = vcmp.eq.s32.totalorder %v369, %v382
    %vm395 = vcmp.eq.s32.totalorder %v372, %v382
    %vm396 = vcmp.eq.s32.totalorder %v375, %v382
    %vm397 = vcmp.eq.s32.totalorder %v378, %v382
    %vm398 = vcmp.eq.s32.totalorder %v381, %v382
    %v399 = vld [vmem:[#allocation3] sm:$0xff]
    %v400 = vld [vmem:[#allocation3 + $0x8] sm:$0xff]
    %v401 = vld [vmem:[#allocation3 + $0x10] sm:$0xff]
    %v402 = vld [vmem:[#allocation3 + $0x18] sm:$0xff]
    %v403 = vld [vmem:[#allocation3 + $0x20] sm:$0xff]
    %v404 = vld [vmem:[#allocation3 + $0x28] sm:$0xff]
    %v405 = vld [vmem:[#allocation3 + $0x30] sm:$0xff]
    %v406 = vld [vmem:[#allocation3 + $0x38] sm:$0xff]
    %v407 = vld [vmem:[#allocation3 + $0x40] sm:$0xff]
    %v408 = vld [vmem:[#allocation3 + $0x48] sm:$0xff]
    %v409 = vld [vmem:[#allocation3 + $0x50] sm:$0xff]
    %v410 = vld [vmem:[#allocation3 + $0x58] sm:$0xff]
    %v411 = vld [vmem:[#allocation3 + $0x60] sm:$0xff]
    %v412 = vld [vmem:[#allocation3 + $0x68] sm:$0xff]
    %v413 = vld [vmem:[#allocation3 + $0x70] sm:$0xff]
    %v414 = vld [vmem:[#allocation3 + $0x78] sm:$0xff]
    %v415 = vsel %vm383, %v198, 0.0
    %v416 = vsel %vm384, %v200, 0.0
    %v417 = vsel %vm385, %v203, 0.0
    %v418 = vsel %vm386, %v205, 0.0
    %v419 = vsel %vm387, %v208, 0.0
    %v420 = vsel %vm388, %v210, 0.0
    %v421 = vsel %vm389, %v213, 0.0
    %v422 = vsel %vm390, %v215, 0.0
    %v423 = vsel %vm391, %v218, 0.0
    %v424 = vsel %vm392, %v220, 0.0
    %v425 = vsel %vm393, %v223, 0.0
    %v426 = vsel %vm394, %v225, 0.0
    %v427 = vsel %vm395, %v228, 0.0
    %v428 = vsel %vm396, %v230, 0.0
    %v429 = vsel %vm397, %v233, 0.0
    %v430 = vsel %vm398, %v235, 0.0
    %v431 = vadd.f32 %v399, %v415
    %v432 = vadd.f32 %v400, %v416
    %v433 = vadd.f32 %v401, %v417
    %v434 = vadd.f32 %v402, %v418
    %v435 = vadd.f32 %v403, %v419
    %v436 = vadd.f32 %v404, %v420
    %v437 = vadd.f32 %v405, %v421
    %v438 = vadd.f32 %v406, %v422
    %v439 = vadd.f32 %v407, %v423
    %v440 = vadd.f32 %v408, %v424
    %v441 = vadd.f32 %v409, %v425
    %v442 = vadd.f32 %v410, %v426
    %v443 = vadd.f32 %v411, %v427
    %v444 = vadd.f32 %v412, %v428
    %v445 = vadd.f32 %v413, %v429
    %v446 = vadd.f32 %v414, %v430
    %447 = vst [vmem:[#allocation3] sm:$0xff] %v431
    %448 = vst [vmem:[#allocation3 + $0x8] sm:$0xff] %v432
    %449 = vst [vmem:[#allocation3 + $0x10] sm:$0xff] %v433
    %450 = vst [vmem:[#allocation3 + $0x18] sm:$0xff] %v434
    %451 = vst [vmem:[#allocation3 + $0x20] sm:$0xff] %v435
    %452 = vst [vmem:[#allocation3 + $0x28] sm:$0xff] %v436
    %453 = vst [vmem:[#allocation3 + $0x30] sm:$0xff] %v437
    %454 = vst [vmem:[#allocation3 + $0x38] sm:$0xff] %v438
    %455 = vst [vmem:[#allocation3 + $0x40] sm:$0xff] %v439
    %456 = vst [vmem:[#allocation3 + $0x48] sm:$0xff] %v440
    %457 = vst [vmem:[#allocation3 + $0x50] sm:$0xff] %v441
    %458 = vst [vmem:[#allocation3 + $0x58] sm:$0xff] %v442
    %459 = vst [vmem:[#allocation3 + $0x60] sm:$0xff] %v443
    %460 = vst [vmem:[#allocation3 + $0x68] sm:$0xff] %v444
    %461 = vst [vmem:[#allocation3 + $0x70] sm:$0xff] %v445
    %462 = vst [vmem:[#allocation3 + $0x78] sm:$0xff] %v446
    // Predicated region
    $region30: #{tpu_custom_call.1} parent=1 // pred_check
      %p463 = pneg %p24
    $region31: #{tpu_custom_call.1} parent=1 // pred_check_branch
      %465 = sbr.rel (%p463) target = $region33
    $region32: #{tpu_custom_call.1} parent=1 // pred_region
      %v466 = vld [vmem:[#allocation2] sm:$0xff]
      %v467 = vld [vmem:[#allocation2 + $0x8] sm:$0xff]
      %v468 = vld [vmem:[#allocation2 + $0x10] sm:$0xff]
      %v469 = vld [vmem:[#allocation2 + $0x18] sm:$0xff]
      %v470 = vld [vmem:[#allocation2 + $0x20] sm:$0xff]
      %v471 = vld [vmem:[#allocation2 + $0x28] sm:$0xff]
      %v472 = vld [vmem:[#allocation2 + $0x30] sm:$0xff]
      %v473 = vld [vmem:[#allocation2 + $0x38] sm:$0xff]
      %v474 = vld [vmem:[#allocation2 + $0x40] sm:$0xff]
      %v475 = vld [vmem:[#allocation2 + $0x48] sm:$0xff]
      %v476 = vld [vmem:[#allocation2 + $0x50] sm:$0xff]
      %v477 = vld [vmem:[#allocation2 + $0x58] sm:$0xff]
      %v478 = vld [vmem:[#allocation2 + $0x60] sm:$0xff]
      %v479 = vld [vmem:[#allocation2 + $0x68] sm:$0xff]
      %v480 = vld [vmem:[#allocation2 + $0x70] sm:$0xff]
      %v481 = vld [vmem:[#allocation2 + $0x78] sm:$0xff]
      %482 = vadd.xlane.f32.xlu0 %v466
      %v483 = vpop.xlane.xlu0 %482
      %484 = vadd.xlane.f32.xlu0 %v467
      %v485 = vpop.xlane.xlu0 %484
      %486 = vadd.xlane.f32.xlu0 %v468
      %v487 = vpop.xlane.xlu0 %486
      %488 = vadd.xlane.f32.xlu0 %v469
      %v489 = vpop.xlane.xlu0 %488
      %490 = vadd.xlane.f32.xlu0 %v470
      %v491 = vpop.xlane.xlu0 %490
      %492 = vadd.xlane.f32.xlu0 %v471
      %v493 = vpop.xlane.xlu0 %492
      %494 = vadd.xlane.f32.xlu0 %v472
      %v495 = vpop.xlane.xlu0 %494
      %496 = vadd.xlane.f32.xlu0 %v473
      %v497 = vpop.xlane.xlu0 %496
      %498 = vadd.xlane.f32.xlu0 %v474
      %v499 = vpop.xlane.xlu0 %498
      %500 = vadd.xlane.f32.xlu0 %v475
      %v501 = vpop.xlane.xlu0 %500
      %502 = vadd.xlane.f32.xlu0 %v476
      %v503 = vpop.xlane.xlu0 %502
      %504 = vadd.xlane.f32.xlu0 %v477
      %v505 = vpop.xlane.xlu0 %504
      %506 = vadd.xlane.f32.xlu0 %v478
      %v507 = vpop.xlane.xlu0 %506
      %508 = vadd.xlane.f32.xlu0 %v479
      %v509 = vpop.xlane.xlu0 %508
      %510 = vadd.xlane.f32.xlu0 %v480
      %v511 = vpop.xlane.xlu0 %510
      %512 = vadd.xlane.f32.xlu0 %v481
      %v513 = vpop.xlane.xlu0 %512
      %v514 = vld [vmem:[#allocation3] sm:$0xff]
      %v515 = vld [vmem:[#allocation3 + $0x8] sm:$0xff]
      %v516 = vld [vmem:[#allocation3 + $0x10] sm:$0xff]
      %v517 = vld [vmem:[#allocation3 + $0x18] sm:$0xff]
      %v518 = vld [vmem:[#allocation3 + $0x20] sm:$0xff]
      %v519 = vld [vmem:[#allocation3 + $0x28] sm:$0xff]
      %v520 = vld [vmem:[#allocation3 + $0x30] sm:$0xff]
      %v521 = vld [vmem:[#allocation3 + $0x38] sm:$0xff]
      %v522 = vld [vmem:[#allocation3 + $0x40] sm:$0xff]
      %v523 = vld [vmem:[#allocation3 + $0x48] sm:$0xff]
      %v524 = vld [vmem:[#allocation3 + $0x50] sm:$0xff]
      %v525 = vld [vmem:[#allocation3 + $0x58] sm:$0xff]
      %v526 = vld [vmem:[#allocation3 + $0x60] sm:$0xff]
      %v527 = vld [vmem:[#allocation3 + $0x68] sm:$0xff]
      %v528 = vld [vmem:[#allocation3 + $0x70] sm:$0xff]
      %v529 = vld [vmem:[#allocation3 + $0x78] sm:$0xff]
      %530 = vadd.xlane.f32.xlu0 %v514
      %v531 = vpop.xlane.xlu0 %530
      %532 = vadd.xlane.f32.xlu0 %v515
      %v533 = vpop.xlane.xlu0 %532
      %534 = vadd.xlane.f32.xlu0 %v516
      %v535 = vpop.xlane.xlu0 %534
      %536 = vadd.xlane.f32.xlu0 %v517
      %v537 = vpop.xlane.xlu0 %536
      %538 = vadd.xlane.f32.xlu0 %v518
      %v539 = vpop.xlane.xlu0 %538
      %540 = vadd.xlane.f32.xlu0 %v519
      %v541 = vpop.xlane.xlu0 %540
      %542 = vadd.xlane.f32.xlu0 %v520
      %v543 = vpop.xlane.xlu0 %542
      %544 = vadd.xlane.f32.xlu0 %v521
      %v545 = vpop.xlane.xlu0 %544
      %546 = vadd.xlane.f32.xlu0 %v522
      %v547 = vpop.xlane.xlu0 %546
      %548 = vadd.xlane.f32.xlu0 %v523
      %v549 = vpop.xlane.xlu0 %548
      %550 = vadd.xlane.f32.xlu0 %v524
      %v551 = vpop.xlane.xlu0 %550
      %552 = vadd.xlane.f32.xlu0 %v525
      %v553 = vpop.xlane.xlu0 %552
      %554 = vadd.xlane.f32.xlu0 %v526
      %v555 = vpop.xlane.xlu0 %554
      %556 = vadd.xlane.f32.xlu0 %v527
      %v557 = vpop.xlane.xlu0 %556
      %558 = vadd.xlane.f32.xlu0 %v528
      %v559 = vpop.xlane.xlu0 %558
      %560 = vadd.xlane.f32.xlu0 %v529
      %v561 = vpop.xlane.xlu0 %560
      %v562 = vld [vmem:[%s5] sm:$0xff]
      %v563 = vld [vmem:[%s5 + $0x8] sm:$0xff]
      %v564 = vld [vmem:[%s5 + $0x10] sm:$0xff]
      %v565 = vld [vmem:[%s5 + $0x18] sm:$0xff]
      %v566 = vld [vmem:[%s5 + $0x20] sm:$0xff]
      %v567 = vld [vmem:[%s5 + $0x28] sm:$0xff]
      %v568 = vld [vmem:[%s5 + $0x30] sm:$0xff]
      %v569 = vld [vmem:[%s5 + $0x38] sm:$0xff]
      %v570 = vld [vmem:[%s5 + $0x40] sm:$0xff]
      %v571 = vld [vmem:[%s5 + $0x48] sm:$0xff]
      %v572 = vld [vmem:[%s5 + $0x50] sm:$0xff]
      %v573 = vld [vmem:[%s5 + $0x58] sm:$0xff]
      %v574 = vld [vmem:[%s5 + $0x60] sm:$0xff]
      %v575 = vld [vmem:[%s5 + $0x68] sm:$0xff]
      %v576 = vld [vmem:[%s5 + $0x70] sm:$0xff]
      %v577 = vld [vmem:[%s5 + $0x78] sm:$0xff]
      %v578 = vmul.f32 %v562, 1.442695
      %v579 = vpow.pop %v578
      %v580 = vmul.f32 %v563, 1.442695
      %v581 = vpow.pop %v580
      %v582 = vmul.f32 %v564, 1.442695
      %v583 = vpow.pop %v582
      %v584 = vmul.f32 %v565, 1.442695
      %v585 = vpow.pop %v584
      %v586 = vmul.f32 %v566, 1.442695
      %v587 = vpow.pop %v586
      %v588 = vmul.f32 %v567, 1.442695
      %v589 = vpow.pop %v588
      %v590 = vmul.f32 %v568, 1.442695
      %v591 = vpow.pop %v590
      %v592 = vmul.f32 %v569, 1.442695
      %v593 = vpow.pop %v592
      %v594 = vmul.f32 %v570, 1.442695
      %v595 = vpow.pop %v594
      %v596 = vmul.f32 %v571, 1.442695
      %v597 = vpow.pop %v596
      %v598 = vmul.f32 %v572, 1.442695
      %v599 = vpow.pop %v598
      %v600 = vmul.f32 %v573, 1.442695
      %v601 = vpow.pop %v600
      %v602 = vmul.f32 %v574, 1.442695
      %v603 = vpow.pop %v602
      %v604 = vmul.f32 %v575, 1.442695
      %v605 = vpow.pop %v604
      %v606 = vmul.f32 %v576, 1.442695
      %v607 = vpow.pop %v606
      %v608 = vmul.f32 %v577, 1.442695
      %v609 = vpow.pop %v608
      %v610 = vsub.f32 %v483, %v579
      %v611 = vsub.f32 %v485, %v581
      %v612 = vsub.f32 %v487, %v583
      %v613 = vsub.f32 %v489, %v585
      %v614 = vsub.f32 %v491, %v587
      %v615 = vsub.f32 %v493, %v589
      %v616 = vsub.f32 %v495, %v591
      %v617 = vsub.f32 %v497, %v593
      %v618 = vsub.f32 %v499, %v595
      %v619 = vsub.f32 %v501, %v597
      %v620 = vsub.f32 %v503, %v599
      %v621 = vsub.f32 %v505, %v601
      %v622 = vsub.f32 %v507, %v603
      %v623 = vsub.f32 %v509, %v605
      %v624 = vsub.f32 %v511, %v607
      %v625 = vsub.f32 %v513, %v609
      %v626 = vsub.f32 %v610, 120.0
      %v627 = vsub.f32 %v611, 120.0
      %v628 = vsub.f32 %v612, 120.0
      %v629 = vsub.f32 %v613, 120.0
      %v630 = vsub.f32 %v614, 120.0
      %v631 = vsub.f32 %v615, 120.0
      %v632 = vsub.f32 %v616, 120.0
      %v633 = vsub.f32 %v617, 120.0
      %v634 = vsub.f32 %v618, 120.0
      %v635 = vsub.f32 %v619, 120.0
      %v636 = vsub.f32 %v620, 120.0
      %v637 = vsub.f32 %v621, 120.0
      %v638 = vsub.f32 %v622, 120.0
      %v639 = vsub.f32 %v623, 120.0
      %v640 = vsub.f32 %v624, 120.0
      %v641 = vsub.f32 %v625, 120.0
      %v642 = vmax.f32 %v626, 1e-30
      %v643 = vmax.f32 %v627, 1e-30
      %v644 = vmax.f32 %v628, 1e-30
      %v645 = vmax.f32 %v629, 1e-30
      %v646 = vmax.f32 %v630, 1e-30
      %v647 = vmax.f32 %v631, 1e-30
      %v648 = vmax.f32 %v632, 1e-30
      %v649 = vmax.f32 %v633, 1e-30
      %v650 = vmax.f32 %v634, 1e-30
      %v651 = vmax.f32 %v635, 1e-30
      %v652 = vmax.f32 %v636, 1e-30
      %v653 = vmax.f32 %v637, 1e-30
      %v654 = vmax.f32 %v638, 1e-30
      %v655 = vmax.f32 %v639, 1e-30
      %v656 = vmax.f32 %v640, 1e-30
      %v657 = vmax.f32 %v641, 1e-30
      %v658 = vlog2.pop %v642
      %v659 = vmul.f32 %v658, 0.6931472
      %v660 = vlog2.pop %v643
      %v661 = vmul.f32 %v660, 0.6931472
      %v662 = vlog2.pop %v644
      %v663 = vmul.f32 %v662, 0.6931472
      %v664 = vlog2.pop %v645
      %v665 = vmul.f32 %v664, 0.6931472
      %v666 = vlog2.pop %v646
      %v667 = vmul.f32 %v666, 0.6931472
      %v668 = vlog2.pop %v647
      %v669 = vmul.f32 %v668, 0.6931472
      %v670 = vlog2.pop %v648
      %v671 = vmul.f32 %v670, 0.6931472
      %v672 = vlog2.pop %v649
      %v673 = vmul.f32 %v672, 0.6931472
      %v674 = vlog2.pop %v650
      %v675 = vmul.f32 %v674, 0.6931472
      %v676 = vlog2.pop %v651
      %v677 = vmul.f32 %v676, 0.6931472
      %v678 = vlog2.pop %v652
      %v679 = vmul.f32 %v678, 0.6931472
      %v680 = vlog2.pop %v653
      %v681 = vmul.f32 %v680, 0.6931472
      %v682 = vlog2.pop %v654
      %v683 = vmul.f32 %v682, 0.6931472
      %v684 = vlog2.pop %v655
      %v685 = vmul.f32 %v684, 0.6931472
      %v686 = vlog2.pop %v656
      %v687 = vmul.f32 %v686, 0.6931472
      %v688 = vlog2.pop %v657
      %v689 = vmul.f32 %v688, 0.6931472
      %v690 = vld [vmem:[%s4] sm:$0xff]
      %v691 = vld [vmem:[%s4 + $0x8] sm:$0xff]
      %v692 = vld [vmem:[%s4 + $0x10] sm:$0xff]
      %v693 = vld [vmem:[%s4 + $0x18] sm:$0xff]
      %v694 = vld [vmem:[%s4 + $0x20] sm:$0xff]
      %v695 = vld [vmem:[%s4 + $0x28] sm:$0xff]
      %v696 = vld [vmem:[%s4 + $0x30] sm:$0xff]
      %v697 = vld [vmem:[%s4 + $0x38] sm:$0xff]
      %v698 = vld [vmem:[%s4 + $0x40] sm:$0xff]
      %v699 = vld [vmem:[%s4 + $0x48] sm:$0xff]
      %v700 = vld [vmem:[%s4 + $0x50] sm:$0xff]
      %v701 = vld [vmem:[%s4 + $0x58] sm:$0xff]
      %v702 = vld [vmem:[%s4 + $0x60] sm:$0xff]
      %v703 = vld [vmem:[%s4 + $0x68] sm:$0xff]
      %v704 = vld [vmem:[%s4 + $0x70] sm:$0xff]
      %v705 = vld [vmem:[%s4 + $0x78] sm:$0xff]
      %vm706 = vcmp.gt.f32.partialorder %v690, 0.0
      %vm707 = vcmp.gt.f32.partialorder %v691, 0.0
      %vm708 = vcmp.gt.f32.partialorder %v692, 0.0
      %vm709 = vcmp.gt.f32.partialorder %v693, 0.0
      %vm710 = vcmp.gt.f32.partialorder %v694, 0.0
      %vm711 = vcmp.gt.f32.partialorder %v695, 0.0
      %vm712 = vcmp.gt.f32.partialorder %v696, 0.0
      %vm713 = vcmp.gt.f32.partialorder %v697, 0.0
      %vm714 = vcmp.gt.f32.partialorder %v698, 0.0
      %vm715 = vcmp.gt.f32.partialorder %v699, 0.0
      %vm716 = vcmp.gt.f32.partialorder %v700, 0.0
      %vm717 = vcmp.gt.f32.partialorder %v701, 0.0
      %vm718 = vcmp.gt.f32.partialorder %v702, 0.0
      %vm719 = vcmp.gt.f32.partialorder %v703, 0.0
      %vm720 = vcmp.gt.f32.partialorder %v704, 0.0
      %vm721 = vcmp.gt.f32.partialorder %v705, 0.0
      %v722 = vsub.f32 %v531, %v562
      %v723 = vsub.f32 %v533, %v563
      %v724 = vsub.f32 %v535, %v564
      %v725 = vsub.f32 %v537, %v565
      %v726 = vsub.f32 %v539, %v566
      %v727 = vsub.f32 %v541, %v567
      %v728 = vsub.f32 %v543, %v568
      %v729 = vsub.f32 %v545, %v569
      %v730 = vsub.f32 %v547, %v570
      %v731 = vsub.f32 %v549, %v571
      %v732 = vsub.f32 %v551, %v572
      %v733 = vsub.f32 %v553, %v573
      %v734 = vsub.f32 %v555, %v574
      %v735 = vsub.f32 %v557, %v575
      %v736 = vsub.f32 %v559, %v576
      %v737 = vsub.f32 %v561, %v577
      %v738 = vmax.f32 %v690, 1.0
      %v739 = vmax.f32 %v691, 1.0
      %v740 = vmax.f32 %v692, 1.0
      %v741 = vmax.f32 %v693, 1.0
      %v742 = vmax.f32 %v694, 1.0
      %v743 = vmax.f32 %v695, 1.0
      %v744 = vmax.f32 %v696, 1.0
      %v745 = vmax.f32 %v697, 1.0
      %v746 = vmax.f32 %v698, 1.0
      %v747 = vmax.f32 %v699, 1.0
      %v748 = vmax.f32 %v700, 1.0
      %v749 = vmax.f32 %v701, 1.0
      %v750 = vmax.f32 %v702, 1.0
      %v751 = vmax.f32 %v703, 1.0
      %v752 = vmax.f32 %v704, 1.0
      %v753 = vmax.f32 %v705, 1.0
      %v754 = vrcp.pop %v738
      %v755 = vmul.f32 %v738, %v754
      %v756 = vsub.f32 1.0, %v755
      %v757 = vmul.f32 %v754, %v756
      %v758 = vadd.f32 %v754, %v757
      %vm759 = vweird.f32 %v738
      %vm760 = vweird.f32 %v754
      %vm761 = vmor %vm759, %vm760
      %v762 = vsel %vm761, %v754, %v758
      %v763 = vand.u32 2147483647, %v738
      %vm764 = vcmp.eq.f32.partialorder %v763, 8.507059e+37
      %v765 = vand.u32 %v738, 2147483648
      %v766 = vor.u32 1.1754944e-38, %v765
      %v767 = vsel %vm764, %v766, %v762
      %v768 = vmul.f32 %v722, %v767
      %v769 = vrcp.pop %v739
      %v770 = vmul.f32 %v739, %v769
      %v771 = vsub.f32 1.0, %v770
      %v772 = vmul.f32 %v769, %v771
      %v773 = vadd.f32 %v769, %v772
      %vm774 = vweird.f32 %v739
      %vm775 = vweird.f32 %v769
      %vm776 = vmor %vm774, %vm775
      %v777 = vsel %vm776, %v769, %v773
      %v778 = vand.u32 2147483647, %v739
      %vm779 = vcmp.eq.f32.partialorder %v778, 8.507059e+37
      %v780 = vand.u32 %v739, 2147483648
      %v781 = vor.u32 1.1754944e-38, %v780
      %v782 = vsel %vm779, %v781, %v777
      %v783 = vmul.f32 %v723, %v782
      %v784 = vrcp.pop %v740
      %v785 = vmul.f32 %v740, %v784
      %v786 = vsub.f32 1.0, %v785
      %v787 = vmul.f32 %v784, %v786
      %v788 = vadd.f32 %v784, %v787
      %vm789 = vweird.f32 %v740
      %vm790 = vweird.f32 %v784
      %vm791 = vmor %vm789, %vm790
      %v792 = vsel %vm791, %v784, %v788
      %v793 = vand.u32 2147483647, %v740
      %vm794 = vcmp.eq.f32.partialorder %v793, 8.507059e+37
      %v795 = vand.u32 %v740, 2147483648
      %v796 = vor.u32 1.1754944e-38, %v795
      %v797 = vsel %vm794, %v796, %v792
      %v798 = vmul.f32 %v724, %v797
      %v799 = vrcp.pop %v741
      %v800 = vmul.f32 %v741, %v799
      %v801 = vsub.f32 1.0, %v800
      %v802 = vmul.f32 %v799, %v801
      %v803 = vadd.f32 %v799, %v802
      %vm804 = vweird.f32 %v741
      %vm805 = vweird.f32 %v799
      %vm806 = vmor %vm804, %vm805
      %v807 = vsel %vm806, %v799, %v803
      %v808 = vand.u32 2147483647, %v741
      %vm809 = vcmp.eq.f32.partialorder %v808, 8.507059e+37
      %v810 = vand.u32 %v741, 2147483648
      %v811 = vor.u32 1.1754944e-38, %v810
      %v812 = vsel %vm809, %v811, %v807
      %v813 = vmul.f32 %v725, %v812
      %v814 = vrcp.pop %v742
      %v815 = vmul.f32 %v742, %v814
      %v816 = vsub.f32 1.0, %v815
      %v817 = vmul.f32 %v814, %v816
      %v818 = vadd.f32 %v814, %v817
      %vm819 = vweird.f32 %v742
      %vm820 = vweird.f32 %v814
      %vm821 = vmor %vm819, %vm820
      %v822 = vsel %vm821, %v814, %v818
      %v823 = vand.u32 2147483647, %v742
      %vm824 = vcmp.eq.f32.partialorder %v823, 8.507059e+37
      %v825 = vand.u32 %v742, 2147483648
      %v826 = vor.u32 1.1754944e-38, %v825
      %v827 = vsel %vm824, %v826, %v822
      %v828 = vmul.f32 %v726, %v827
      %v829 = vrcp.pop %v743
      %v830 = vmul.f32 %v743, %v829
      %v831 = vsub.f32 1.0, %v830
      %v832 = vmul.f32 %v829, %v831
      %v833 = vadd.f32 %v829, %v832
      %vm834 = vweird.f32 %v743
      %vm835 = vweird.f32 %v829
      %vm836 = vmor %vm834, %vm835
      %v837 = vsel %vm836, %v829, %v833
      %v838 = vand.u32 2147483647, %v743
      %vm839 = vcmp.eq.f32.partialorder %v838, 8.507059e+37
      %v840 = vand.u32 %v743, 2147483648
      %v841 = vor.u32 1.1754944e-38, %v840
      %v842 = vsel %vm839, %v841, %v837
      %v843 = vmul.f32 %v727, %v842
      %v844 = vrcp.pop %v744
      %v845 = vmul.f32 %v744, %v844
      %v846 = vsub.f32 1.0, %v845
      %v847 = vmul.f32 %v844, %v846
      %v848 = vadd.f32 %v844, %v847
      %vm849 = vweird.f32 %v744
      %vm850 = vweird.f32 %v844
      %vm851 = vmor %vm849, %vm850
      %v852 = vsel %vm851, %v844, %v848
      %v853 = vand.u32 2147483647, %v744
      %vm854 = vcmp.eq.f32.partialorder %v853, 8.507059e+37
      %v855 = vand.u32 %v744, 2147483648
      %v856 = vor.u32 1.1754944e-38, %v855
      %v857 = vsel %vm854, %v856, %v852
      %v858 = vmul.f32 %v728, %v857
      %v859 = vrcp.pop %v745
      %v860 = vmul.f32 %v745, %v859
      %v861 = vsub.f32 1.0, %v860
      %v862 = vmul.f32 %v859, %v861
      %v863 = vadd.f32 %v859, %v862
      %vm864 = vweird.f32 %v745
      %vm865 = vweird.f32 %v859
      %vm866 = vmor %vm864, %vm865
      %v867 = vsel %vm866, %v859, %v863
      %v868 = vand.u32 2147483647, %v745
      %vm869 = vcmp.eq.f32.partialorder %v868, 8.507059e+37
      %v870 = vand.u32 %v745, 2147483648
      %v871 = vor.u32 1.1754944e-38, %v870
      %v872 = vsel %vm869, %v871, %v867
      %v873 = vmul.f32 %v729, %v872
      %v874 = vrcp.pop %v746
      %v875 = vmul.f32 %v746, %v874
      %v876 = vsub.f32 1.0, %v875
      %v877 = vmul.f32 %v874, %v876
      %v878 = vadd.f32 %v874, %v877
      %vm879 = vweird.f32 %v746
      %vm880 = vweird.f32 %v874
      %vm881 = vmor %vm879, %vm880
      %v882 = vsel %vm881, %v874, %v878
      %v883 = vand.u32 2147483647, %v746
      %vm884 = vcmp.eq.f32.partialorder %v883, 8.507059e+37
      %v885 = vand.u32 %v746, 2147483648
      %v886 = vor.u32 1.1754944e-38, %v885
      %v887 = vsel %vm884, %v886, %v882
      %v888 = vmul.f32 %v730, %v887
      %v889 = vrcp.pop %v747
      %v890 = vmul.f32 %v747, %v889
      %v891 = vsub.f32 1.0, %v890
      %v892 = vmul.f32 %v889, %v891
      %v893 = vadd.f32 %v889, %v892
      %vm894 = vweird.f32 %v747
      %vm895 = vweird.f32 %v889
      %vm896 = vmor %vm894, %vm895
      %v897 = vsel %vm896, %v889, %v893
      %v898 = vand.u32 2147483647, %v747
      %vm899 = vcmp.eq.f32.partialorder %v898, 8.507059e+37
      %v900 = vand.u32 %v747, 2147483648
      %v901 = vor.u32 1.1754944e-38, %v900
      %v902 = vsel %vm899, %v901, %v897
      %v903 = vmul.f32 %v731, %v902
      %v904 = vrcp.pop %v748
      %v905 = vmul.f32 %v748, %v904
      %v906 = vsub.f32 1.0, %v905
      %v907 = vmul.f32 %v904, %v906
      %v908 = vadd.f32 %v904, %v907
      %vm909 = vweird.f32 %v748
      %vm910 = vweird.f32 %v904
      %vm911 = vmor %vm909, %vm910
      %v912 = vsel %vm911, %v904, %v908
      %v913 = vand.u32 2147483647, %v748
      %vm914 = vcmp.eq.f32.partialorder %v913, 8.507059e+37
      %v915 = vand.u32 %v748, 2147483648
      %v916 = vor.u32 1.1754944e-38, %v915
      %v917 = vsel %vm914, %v916, %v912
      %v918 = vmul.f32 %v732, %v917
      %v919 = vrcp.pop %v749
      %v920 = vmul.f32 %v749, %v919
      %v921 = vsub.f32 1.0, %v920
      %v922 = vmul.f32 %v919, %v921
      %v923 = vadd.f32 %v919, %v922
      %vm924 = vweird.f32 %v749
      %vm925 = vweird.f32 %v919
      %vm926 = vmor %vm924, %vm925
      %v927 = vsel %vm926, %v919, %v923
      %v928 = vand.u32 2147483647, %v749
      %vm929 = vcmp.eq.f32.partialorder %v928, 8.507059e+37
      %v930 = vand.u32 %v749, 2147483648
      %v931 = vor.u32 1.1754944e-38, %v930
      %v932 = vsel %vm929, %v931, %v927
      %v933 = vmul.f32 %v733, %v932
      %v934 = vrcp.pop %v750
      %v935 = vmul.f32 %v750, %v934
      %v936 = vsub.f32 1.0, %v935
      %v937 = vmul.f32 %v934, %v936
      %v938 = vadd.f32 %v934, %v937
      %vm939 = vweird.f32 %v750
      %vm940 = vweird.f32 %v934
      %vm941 = vmor %vm939, %vm940
      %v942 = vsel %vm941, %v934, %v938
      %v943 = vand.u32 2147483647, %v750
      %vm944 = vcmp.eq.f32.partialorder %v943, 8.507059e+37
      %v945 = vand.u32 %v750, 2147483648
      %v946 = vor.u32 1.1754944e-38, %v945
      %v947 = vsel %vm944, %v946, %v942
      %v948 = vmul.f32 %v734, %v947
      %v949 = vrcp.pop %v751
      %v950 = vmul.f32 %v751, %v949
      %v951 = vsub.f32 1.0, %v950
      %v952 = vmul.f32 %v949, %v951
      %v953 = vadd.f32 %v949, %v952
      %vm954 = vweird.f32 %v751
      %vm955 = vweird.f32 %v949
      %vm956 = vmor %vm954, %vm955
      %v957 = vsel %vm956, %v949, %v953
      %v958 = vand.u32 2147483647, %v751
      %vm959 = vcmp.eq.f32.partialorder %v958, 8.507059e+37
      %v960 = vand.u32 %v751, 2147483648
      %v961 = vor.u32 1.1754944e-38, %v960
      %v962 = vsel %vm959, %v961, %v957
      %v963 = vmul.f32 %v735, %v962
      %v964 = vrcp.pop %v752
      %v965 = vmul.f32 %v752, %v964
      %v966 = vsub.f32 1.0, %v965
      %v967 = vmul.f32 %v964, %v966
      %v968 = vadd.f32 %v964, %v967
      %vm969 = vweird.f32 %v752
      %vm970 = vweird.f32 %v964
      %vm971 = vmor %vm969, %vm970
      %v972 = vsel %vm971, %v964, %v968
      %v973 = vand.u32 2147483647, %v752
      %vm974 = vcmp.eq.f32.partialorder %v973, 8.507059e+37
      %v975 = vand.u32 %v752, 2147483648
      %v976 = vor.u32 1.1754944e-38, %v975
      %v977 = vsel %vm974, %v976, %v972
      %v978 = vmul.f32 %v736, %v977
      %v979 = vrcp.pop %v753
      %v980 = vmul.f32 %v753, %v979
      %v981 = vsub.f32 1.0, %v980
      %v982 = vmul.f32 %v979, %v981
      %v983 = vadd.f32 %v979, %v982
      %vm984 = vweird.f32 %v753
      %vm985 = vweird.f32 %v979
      %vm986 = vmor %vm984, %vm985
      %v987 = vsel %vm986, %v979, %v983
      %v988 = vand.u32 2147483647, %v753
      %vm989 = vcmp.eq.f32.partialorder %v988, 8.507059e+37
      %v990 = vand.u32 %v753, 2147483648
      %v991 = vor.u32 1.1754944e-38, %v990
      %v992 = vsel %vm989, %v991, %v987
      %v993 = vmul.f32 %v737, %v992
      %v994 = vsub.f32 %v659, %v768
      %v995 = vsub.f32 %v661, %v783
      %v996 = vsub.f32 %v663, %v798
      %v997 = vsub.f32 %v665, %v813
      %v998 = vsub.f32 %v667, %v828
      %v999 = vsub.f32 %v669, %v843
      %v1000 = vsub.f32 %v671, %v858
      %v1001 = vsub.f32 %v673, %v873
      %v1002 = vsub.f32 %v675, %v888
      %v1003 = vsub.f32 %v677, %v903
      %v1004 = vsub.f32 %v679, %v918
      %v1005 = vsub.f32 %v681, %v933
      %v1006 = vsub.f32 %v683, %v948
      %v1007 = vsub.f32 %v685, %v963
      %v1008 = vsub.f32 %v687, %v978
      %v1009 = vsub.f32 %v689, %v993
      %v1010 = vsel %vm706, %v994, 0.0
      %v1011 = vsel %vm707, %v995, 0.0
      %v1012 = vsel %vm708, %v996, 0.0
      %v1013 = vsel %vm709, %v997, 0.0
      %v1014 = vsel %vm710, %v998, 0.0
      %v1015 = vsel %vm711, %v999, 0.0
      %v1016 = vsel %vm712, %v1000, 0.0
      %v1017 = vsel %vm713, %v1001, 0.0
      %v1018 = vsel %vm714, %v1002, 0.0
      %v1019 = vsel %vm715, %v1003, 0.0
      %v1020 = vsel %vm716, %v1004, 0.0
      %v1021 = vsel %vm717, %v1005, 0.0
      %v1022 = vsel %vm718, %v1006, 0.0
      %v1023 = vsel %vm719, %v1007, 0.0
      %v1024 = vsel %vm720, %v1008, 0.0
      %v1025 = vsel %vm721, %v1009, 0.0
      %vm1026 = vcmask 7168
      %v1027 = vsel %vm1026, %v1010, 0.0
      %v1028 = vsel %vm1026, %v1011, 0.0
      %v1029 = vadd.f32 %v1027, %v1028
      %v1030 = vsel %vm1026, %v1012, 0.0
      %v1031 = vadd.f32 %v1029, %v1030
      %v1032 = vsel %vm1026, %v1013, 0.0
      %v1033 = vadd.f32 %v1031, %v1032
      %v1034 = vsel %vm1026, %v1014, 0.0
      %v1035 = vadd.f32 %v1033, %v1034
      %v1036 = vsel %vm1026, %v1015, 0.0
      %v1037 = vadd.f32 %v1035, %v1036
      %v1038 = vsel %vm1026, %v1016, 0.0
      %v1039 = vadd.f32 %v1037, %v1038
      %v1040 = vsel %vm1026, %v1017, 0.0
      %v1041 = vadd.f32 %v1039, %v1040
      %v1042 = vsel %vm1026, %v1018, 0.0
      %v1043 = vadd.f32 %v1041, %v1042
      %v1044 = vsel %vm1026, %v1019, 0.0
      %v1045 = vadd.f32 %v1043, %v1044
      %v1046 = vsel %vm1026, %v1020, 0.0
      %v1047 = vadd.f32 %v1045, %v1046
      %v1048 = vsel %vm1026, %v1021, 0.0
      %v1049 = vadd.f32 %v1047, %v1048
      %v1050 = vsel %vm1026, %v1022, 0.0
      %v1051 = vadd.f32 %v1049, %v1050
      %v1052 = vsel %vm1026, %v1023, 0.0
      %v1053 = vadd.f32 %v1051, %v1052
      %v1054 = vsel %vm1026, %v1024, 0.0
      %v1055 = vadd.f32 %v1053, %v1054
      %v1056 = vsel %vm1026, %v1025, 0.0
      %v1057 = vadd.f32 %v1055, %v1056
      %1058 = vadd.xlane.f32.xlu0 %v1057
      %v1059 = vpop.xlane.xlu0 %1058
      %v1060 = vrot.slane %v1059, 4
      %v1061 = vadd.f32 %v1059, %v1060
      %v1062 = vrot.slane %v1061, 2
      %v1063 = vadd.f32 %v1061, %v1062
      %v1064 = vrot.slane %v1063, 1
      %v1065 = vadd.f32 %v1063, %v1064
      %s1066 = vtos %v1065
      %v1067 = vstv %s1066
      %1068 = vst [vmem:[#allocation4] sm:$0xff] %v1067
    $region33: #{tpu_custom_call.1} parent=1 // pred_fallthru
      _
    // Predicated region
    $region34: #{tpu_custom_call.1} parent=1 // pred_check
      _
    $region35: #{tpu_custom_call.1} parent=1 // pred_check_branch
      %1070 = sbr.rel (0) target = $region37
    $region36: #{tpu_custom_call.1} parent=1 // pred_region
      %1072 = vsyncadd [#allocation5], 0
      %s1074 = sshll.u32 [#allocation4], 4
      %s1075 = int_to_ptr.vmem [resolvable:$true] %s1074
      %s1076 = sshll.u32 %s6, 4
      %s1077 = int_to_ptr.hbm [resolvable:$true] %s1076
      %1079 = dma.vmem_to_hbm [thread:$0]  %s1075, 128, %s1077, [#allocation5]
    $region37: #{tpu_custom_call.1} parent=1 // pred_fallthru
      _
    // Predicated region
    $region38: #{tpu_custom_call.1} parent=1 // pred_check
      _
    $region39: #{tpu_custom_call.1} parent=1 // pred_check_branch
      %1081 = sbr.rel (0) target = $region41
    $region40: #{tpu_custom_call.1} parent=1 // pred_region
      %1083 = dma.done [#allocation5], 128
    $region41: #{tpu_custom_call.1} parent=1 // pred_fallthru
      _
    %1084 = vsyncpa [#allocation5], 1

</llo_original>
